<compile_context>
chip_gen: v6e
topology: v6e:2x2x1
jax: 0.10.0
libtpu: 0.0.40
codegen_flags: <defaults>
</compile_context>

<pallas_src>
import jax
import jax.numpy as jnp
from jax.experimental import pallas as pl
from jax.experimental.pallas import tpu as pltpu


def _linear_kernel(w_ref, b_ref, x_ref, o_ref):
    # w_ref: (F, 1) weight column   (grid-invariant, DMA'd once)
    # b_ref: (1, 1) bias            (grid-invariant, DMA'd once)
    # x_ref: (TB, F) input tile     (natural layout, F on the lane axis)
    # o_ref: (TB, 1) output tile
    y = jnp.dot(x_ref[...], w_ref[...], preferred_element_type=jnp.float32)
    o_ref[...] = (y + b_ref[...]).astype(o_ref.dtype)


def linear_forward(x, weight, bias, *, tb=8192, vmem_limit_bytes=44 * 1024 * 1024):
    """Pallas-backed equivalent of torch.nn.Linear(10, 1).forward(x).

    x:      (B, F) floating point (cast to f32 if needed)
    weight: (O, F) PyTorch nn.Linear layout; O must be 1
    bias:   (O,)
    returns (B, O) float32
    """
    B, F = x.shape
    O, F2 = weight.shape
    assert F == F2, "in_features mismatch"
    assert O == 1, "this kernel is specialized for out_features == 1"

    if x.dtype != jnp.float32:
        x = x.astype(jnp.float32)
    w_col = weight.astype(jnp.float32).T            # (F, 1): 40 bytes, reshaped once
    b2d = bias.astype(jnp.float32).reshape(1, 1)    # (1, 1)

    # Batch tile: full-array block when B is small, else a multiple-of-8 tile.
    if B <= tb:
        tb_eff = B
    else:
        tb_eff = max(8, (tb // 8) * 8)
    grid = (pl.cdiv(B, tb_eff),)   # ragged tail handled by Pallas block masking

    cost = pl.CostEstimate(
        flops=2 * B * F,
        transcendentals=0,
        bytes_accessed=4 * (B * F + B * O + F * O + O),   # ~44 B per row
    )

    return pl.pallas_call(
        _linear_kernel,
        out_shape=jax.ShapeDtypeStruct((B, O), jnp.float32),
        grid=grid,
        in_specs=[
            pl.BlockSpec((F, O), lambda i: (0, 0)),        # weight: DMA'd once
            pl.BlockSpec((1, 1), lambda i: (0, 0)),        # bias:   DMA'd once
            pl.BlockSpec((tb_eff, F), lambda i: (i, 0)),   # x tile, natural layout
        ],
        out_specs=pl.BlockSpec((tb_eff, O), lambda i: (i, 0)),  # y written in caller layout
        compiler_params=pltpu.CompilerParams(
            dimension_semantics=("parallel",),   # v7x: 2-TC split when grid >= 2
            vmem_limit_bytes=vmem_limit_bytes,
        ),
        cost_estimate=cost,
    )(w_col, b2d, x)


if __name__ == "__main__":
    key = jax.random.PRNGKey(0)
    k_w, k_b, k1, k2, k3 = jax.random.split(key, 5)

    IN_FEATURES, OUT_FEATURES = 10, 1

    # Deterministic init mimicking nn.Linear's U(-1/sqrt(fan_in), 1/sqrt(fan_in)).
    bound = 1.0 / (IN_FEATURES ** 0.5)
    weight = jax.random.uniform(
        k_w, (OUT_FEATURES, IN_FEATURES), jnp.float32, minval=-bound, maxval=bound
    )
    bias = jax.random.uniform(
        k_b, (OUT_FEATURES,), jnp.float32, minval=-bound, maxval=bound
    )

    def reference(x):
        # Exact-f32 reference (VPU mul + reduce; avoids XLA's default low-precision
        # matmul pass so the comparison is meaningful).
        return jnp.sum(x * weight[0][None, :], axis=1, keepdims=True) + bias[None, :]

    def check(x, out):
        ref = reference(x)
        assert out.shape == ref.shape, (out.shape, ref.shape)
        # 5e-3 slack accommodates MXU f32-via-bf16-pass rounding; genuine
        # layout/indexing bugs produce O(1) errors and still fail this check.
        assert jnp.allclose(out, ref, atol=5e-3, rtol=5e-3), "mismatch vs reference"

    # 1) Small batch consistent with the module (single full-array block).
    x_small = jax.random.normal(k1, (8, IN_FEATURES), jnp.float32)
    out_small = jax.block_until_ready(linear_forward(x_small, weight, bias))
    check(x_small, out_small)

    # 2) Multi-step grid with a ragged trailing block (300 = 2*128 + 44 rows).
    x_mid = jax.random.normal(k2, (300, IN_FEATURES), jnp.float32)
    out_mid = jax.block_until_ready(linear_forward(x_mid, weight, bias, tb=128))
    check(x_mid, out_mid)

    # 3) Large batch on the default big-tile path (grid = 5, partial tail).
    x_big = jax.random.normal(k3, (40000, IN_FEATURES), jnp.float32)
    out_big = jax.block_until_ready(linear_forward(x_big, weight, bias))
    check(x_big, out_big)

    print("KERNEL_OK")
</pallas_src>

<mosaic_0001>
module attributes {stable_mosaic.version = 11 : i64} {
  func.func @_linear_kernel(%arg0: i32, %arg1: memref<10x1xf32, #tpu.memory_space<vmem>>, %arg2: memref<1x1xf32, #tpu.memory_space<vmem>>, %arg3: memref<8x10xf32, #tpu.memory_space<vmem>>, %arg4: memref<8x1xf32, #tpu.memory_space<vmem>>) attributes {dimension_semantics = [#tpu.dimension_semantics<parallel>], iteration_bounds = array<i64: 1>, scalar_prefetch = 0 : i64, scratch_operands = 0 : i64, tpu.core_type = #tpu.core_type<tc>, window_params = [{pipeline_mode = #tpu.pipeline_mode<synchronous>, transform_indices = @transform_0, window_bounds = array<i64: 10, 1>}, {pipeline_mode = #tpu.pipeline_mode<synchronous>, transform_indices = @transform_1, window_bounds = array<i64: 1, 1>}, {transform_indices = @transform_2, window_bounds = array<i64: 8, 10>}, {transform_indices = @transform_3, window_bounds = array<i64: 8, 1>}]} {
    %c0 = arith.constant 0 : index
    %c0_0 = arith.constant 0 : index
    %0 = vector.load %arg3[%c0, %c0_0] : memref<8x10xf32, #tpu.memory_space<vmem>>, vector<8x10xf32>
    %c0_1 = arith.constant 0 : index
    %c0_2 = arith.constant 0 : index
    %1 = vector.load %arg1[%c0_1, %c0_2] : memref<10x1xf32, #tpu.memory_space<vmem>>, vector<10x1xf32>
    %cst = arith.constant dense<0.000000e+00> : vector<8x1xf32>
    %2 = tpu.matmul %0, %1, %cst {dimension_numbers = #tpu.dot_dimension_numbers<[1], [0], [0], [1], [0, 0, 1, 1], [], []>} : vector<8x10xf32>, vector<10x1xf32>, vector<8x1xf32> -> vector<8x1xf32>
    %c0_3 = arith.constant 0 : index
    %c0_4 = arith.constant 0 : index
    %3 = vector.load %arg2[%c0_3, %c0_4] : memref<1x1xf32, #tpu.memory_space<vmem>>, vector<1x1xf32>
    %4 = vector.broadcast %3 : vector<1x1xf32> to vector<8x1xf32>
    %5 = arith.addf %2, %4 : vector<8x1xf32>
    %c0_5 = arith.constant 0 : index
    %c0_6 = arith.constant 0 : index
    %6 = vector.load %arg4[%c0_5, %c0_6] : memref<8x1xf32, #tpu.memory_space<vmem>>, vector<8x1xf32>
    tpu.vector_store %arg4[%c0_5, %c0_6], %5 {strides = array<i32>} : memref<8x1xf32, #tpu.memory_space<vmem>>, vector<8x1xf32>,
    return
  }
  func.func @transform_0(%arg0: i32) -> (i32, i32) {
    %c0_i32 = arith.constant 0 : i32
    %c0_i32_0 = arith.constant 0 : i32
    %c0_i32_1 = arith.constant 0 : i32
    return %c0_i32, %c0_i32_0 : i32, i32
  }
  func.func @transform_1(%arg0: i32) -> (i32, i32) {
    %c0_i32 = arith.constant 0 : i32
    %c0_i32_0 = arith.constant 0 : i32
    %c0_i32_1 = arith.constant 0 : i32
    return %c0_i32, %c0_i32_0 : i32, i32
  }
  func.func @transform_2(%arg0: i32) -> (i32, i32) {
    %c0_i32 = arith.constant 0 : i32
    %c0_i32_0 = arith.constant 0 : i32
    return %arg0, %c0_i32 : i32, i32
  }
  func.func @transform_3(%arg0: i32) -> (i32, i32) {
    %c0_i32 = arith.constant 0 : i32
    %c0_i32_0 = arith.constant 0 : i32
    return %arg0, %c0_i32 : i32, i32
  }
}

</mosaic_0001>

<llo_original>
// kernel: tpu_custom_call.1
$region0: #{tpu_custom_call.1}
  #allocation0 [shape = 'u32[]', space=smem, size = 0x4, offset = 0x4, fixed_abs, tag = 'smem constant byte address 0x4 - core index']
  #allocation1 [shape = 'u32[144,128]{1,0:T(1,128)}', space=vmem, size = 0x12000, scoped, tag = 'internal scratch']
  #allocation2 [shape = 'f32[1,1]{1,0:T(1,128)S(1)}', space=vmem, size = 0x200, scoped, tag = 'scoped memory for tpu_custom_call.1']
  %s0 = inlined_call_operand.vmem [shape: f32[10,1], index: 0, kind: input, shape index: {}]
  %s1 = inlined_call_operand.<no memory space> [shape: f32[1,1], index: 1, kind: input, shape index: {}]
  %s2 = inlined_call_operand.vmem [shape: f32[8,10], index: 2, kind: input, shape index: {}]
  %s3 = inlined_call_operand.vmem [shape: f32[8,1], index: 3, kind: output, shape index: {}]
  %s4 = sld [smem:[#allocation0]]
  $region22: #{tpu_custom_call.1} parent=0
    _
  %s6 = ssub.s32 1, %s4
  %s7 = scalar_select 0, %s6, %s4
  %v8 = vstv %s1
  %9 = vst [vmem:[#allocation2] sm:$0x1] %v8
  // Predicated region
  $region2: #{tpu_custom_call.1} parent=0 // pred_check
    _
  $region3: #{tpu_custom_call.1} parent=0 // pred_check_branch
    %11 = sbr.rel (0) target = $region5
  $region4: #{tpu_custom_call.1} parent=0 // pred_region
    _
  $region5: #{tpu_custom_call.1} parent=0 // pred_fallthru
    _
  // Predicated region
  $region6: #{tpu_custom_call.1} parent=0 // pred_check
    _
  $region7: #{tpu_custom_call.1} parent=0 // pred_check_branch
    %13 = sbr.rel (0) target = $region9
  $region8: #{tpu_custom_call.1} parent=0 // pred_region
    _
  $region9: #{tpu_custom_call.1} parent=0 // pred_fallthru
    _
  // Predicated region
  $region10: #{tpu_custom_call.1} parent=0 // pred_check
    _
  $region11: #{tpu_custom_call.1} parent=0 // pred_check_branch
    %15 = sbr.rel (0) target = $region13
  $region12: #{tpu_custom_call.1} parent=0 // pred_region
    _
  $region13: #{tpu_custom_call.1} parent=0 // pred_fallthru
    _
  %v16 = vld [vmem:[%s2] sm:$0xff]
  %v17 = vld [vmem:[%s0] sm:$0xff]
  %v18 = vld [vmem:[%s0 + $0x8] sm:$0x3]
  %v19 = vld [vmem:[#allocation2] sm:$0x1]
  %v21 = vlaneseq
  %v22 = vshrl.u32 %v21, 7
  %v23 = vsub.s32 0, %v22
  %v24 = vrot.slane %v19, %v23
  %vm26 = vcmask 80896
  %v28 = vsel %vm26, %v16, 0
  %vm30 = vcmask 1041408
  %v32 = vsel %vm30, %v18, 0
  %34 = vmatprep.subr.mxu0 0.0
  %35 = vmatpush1.msra.mxu0 0.0
  %36 = vmatprep.subr.mxu0 0.0
  %37 = vmatpush1.msra.mxu0 0.0
  %38 = vmatprep.subr.mxu0 0.0
  %39 = vmatpush1.msra.mxu0 0.0
  %40 = vmatprep.subr.mxu0 0.0
  %41 = vmatpush1.msra.mxu0 0.0
  %42 = vmatprep.subr.mxu0 0.0
  %43 = vmatpush1.msra.mxu0 0.0
  %44 = vmatprep.subr.mxu0 0.0
  %45 = vmatpush1.msra.mxu0 0.0
  %46 = vmatprep.subr.mxu0 0.0
  %47 = vmatpush1.msra.mxu0 0.0
  %48 = vmatprep.subr.mxu0 0.0
  %49 = vmatpush1.msra.mxu0 0.0
  %50 = vmatprep.subr.mxu0 0.0
  %51 = vmatpush1.msra.mxu0 0.0
  %52 = vmatprep.subr.mxu0 0.0
  %53 = vmatpush1.msra.mxu0 0.0
  %54 = vmatprep.subr.mxu0 0.0
  %55 = vmatpush1.msra.mxu0 0.0
  %56 = vmatprep.subr.mxu0 0.0
  %57 = vmatpush1.msra.mxu0 0.0
  %58 = vmatprep.subr.mxu0 0.0
  %59 = vmatpush1.msra.mxu0 0.0
  %60 = vmatprep.subr.mxu0 0.0
  %61 = vmatpush1.msra.mxu0 0.0
  %62 = vmatprep.subr.mxu0 0.0
  %63 = vmatpush1.msra.mxu0 %v32
  %64 = vmatprep.subr.mxu0 0.0
  %65 = vmatpush1.msra.mxu0 %v17
  %66 = vmatprep.subr.mxu0 0.0
  %67 = vmatpush2.msra.mxu0 0.0
  %68 = vmatprep.subr.mxu0 0.0
  %69 = vmatpush2.msra.mxu0 0.0
  %70 = vmatprep.subr.mxu0 0.0
  %71 = vmatpush2.msra.mxu0 0.0
  %72 = vmatprep.subr.mxu0 0.0
  %73 = vmatpush2.msra.mxu0 0.0
  %74 = vmatprep.subr.mxu0 0.0
  %75 = vmatpush2.msra.mxu0 0.0
  %76 = vmatprep.subr.mxu0 0.0
  %77 = vmatpush2.msra.mxu0 0.0
  %78 = vmatprep.subr.mxu0 0.0
  %79 = vmatpush2.msra.mxu0 0.0
  %80 = vmatprep.subr.mxu0 0.0
  %81 = vmatpush2.msra.mxu0 0.0
  %82 = vmatprep.subr.mxu0 0.0
  %83 = vmatpush2.msra.mxu0 0.0
  %84 = vmatprep.subr.mxu0 0.0
  %85 = vmatpush2.msra.mxu0 0.0
  %86 = vmatprep.subr.mxu0 0.0
  %87 = vmatpush2.msra.mxu0 0.0
  %88 = vmatprep.subr.mxu0 0.0
  %89 = vmatpush2.msra.mxu0 0.0
  %90 = vmatprep.subr.mxu0 0.0
  %91 = vmatpush2.msra.mxu0 0.0
  %92 = vmatprep.subr.mxu0 0.0
  %93 = vmatpush2.msra.mxu0 0.0
  %94 = vmatprep.subr.mxu0 0.0
  %95 = vmatpush2.msra.mxu0 0.0
  %96 = vmatprep.subr.mxu0 0.0
  %97 = vmatpush2.msra.mxu0 0.0
  %98 = vmatprep.mubr.f32.mxu0 0.0
  %99 = vmatmul.mubr.f32.gmra.mxu0 %v28
  %v100 = vpop.f32.mrf.mxu0
  %v101 = vadd.f32 %v24, %v100
  %v102 = vpop.f32.mrf.mxu0
  %103 = vdwg.mxu0
  %vm104 = vcmask 7168
  %105 = vst.msk [vmem:[%s3] sm:$0xff] %vm104, %v101
  // Predicated region
  $region14: #{tpu_custom_call.1} parent=0 // pred_check
    _
  $region15: #{tpu_custom_call.1} parent=0 // pred_check_branch
    %107 = sbr.rel (0) target = $region17
  $region16: #{tpu_custom_call.1} parent=0 // pred_region
    _
  $region17: #{tpu_custom_call.1} parent=0 // pred_fallthru
    _
  // Predicated region
  $region18: #{tpu_custom_call.1} parent=0 // pred_check
    _
  $region19: #{tpu_custom_call.1} parent=0 // pred_check_branch
    %109 = sbr.rel (0) target = $region21
  $region20: #{tpu_custom_call.1} parent=0 // pred_region
    _
  $region21: #{tpu_custom_call.1} parent=0 // pred_fallthru
    _

</llo_original>
